<compile_context>
chip_gen: v7x
topology: tpu7x:2x2x1
jax: 0.10.0
libtpu: 0.0.40
codegen_flags: <defaults>
</compile_context>

<pallas_src>
import functools

import jax
import jax.numpy as jnp
from jax.experimental import pallas as pl
from jax.experimental.pallas import tpu as pltpu

_TK_LARGE = 512          # 256-aligned slab for the 2x256^2 MXUs (v6e/v7x)
_SINGLE_STEP_MAX_D = 2048  # below this, do the whole reduction in one step


def _triplet_kernel(margin, d, tk, x_ref, t_col_ref, t_row_ref,
                    loss_ref, correct_ref, gram_ref, norm_ref):
    k = pl.program_id(0)

    @pl.when(k == 0)
    def _():
        gram_ref[...] = jnp.zeros_like(gram_ref)
        norm_ref[...] = jnp.zeros_like(norm_ref)

    x = x_ref[...]                                            # (n, tk) native dtype

    # Zero-mask out-of-bounds tail lanes (only emitted when d % tk != 0; for
    # non-last chunks the predicate is all-true and the select is a no-op).
    if d % tk != 0:
        col = jax.lax.broadcasted_iota(jnp.int32, x.shape, 1)
        valid = (k * tk + col) < d
        x = jnp.where(valid, x, jnp.zeros_like(x))

    # Squared-norm accumulator in f32 (VPU; overlaps the MXU).
    xf = x.astype(jnp.float32)
    norm_ref[...] += jnp.sum(xf * xf, axis=1, keepdims=True)  # (n, 1)

    # Gram accumulation on the MXU, f32 accumulation.
    gram_ref[...] += jax.lax.dot_general(
        x, x, (((1,), (1,)), ((), ())),
        preferred_element_type=jnp.float32)

    @pl.when(k == pl.num_programs(0) - 1)
    def _():
        gram = gram_ref[...]                                  # (n, n) f32
        n = gram.shape[0]

        sq_col = norm_ref[...]                                # (n, 1)
        sq_row = jnp.transpose(sq_col)                        # (1, n) — one tiny XLU op

        # Pairwise squared distances; mining happens on dist2 (sqrt/clamp are
        # monotone on the mined values, so results match the reference).
        dist2 = sq_col + sq_row - 2.0 * gram                  # (n, n)

        # Positive-pair mask (same label) by broadcasting column vs row labels.
        mask = t_col_ref[...] == t_row_ref[...]               # (n, n) bool

        dist_ap2 = jnp.max(jnp.where(mask, dist2, -jnp.inf), axis=1, keepdims=True)
        dist_an2 = jnp.min(jnp.where(mask, jnp.inf, dist2), axis=1, keepdims=True)
        dist_ap = jnp.sqrt(jnp.maximum(dist_ap2, 1e-12))      # (n, 1)
        dist_an = jnp.sqrt(jnp.maximum(dist_an2, 1e-12))      # (n, 1)

        # MarginRankingLoss with y = 1: mean(relu(dist_ap - dist_an + margin))
        losses = jnp.maximum(dist_ap - dist_an + margin, 0.0)
        loss_ref[...] = jnp.sum(losses, axis=(0, 1), keepdims=True) * (1.0 / n)

        # correct = number of rows where dist_an >= dist_ap
        cmp = (dist_an >= dist_ap).astype(jnp.float32)
        correct_ref[...] = jnp.sum(cmp, axis=(0, 1), keepdims=True).astype(jnp.int32)


def ori_triplet_loss(inputs, targets, margin=0.3, block_k=None):
    """Pallas implementation of OriTripletLoss.forward.

    Args:
      inputs: (n, feat_dim) float feature matrix (f32 or bf16).
      targets: (n,) integer class labels.
      margin: triplet margin.
      block_k: optional feature-axis tile override (multiple of 128, or >= d).
    Returns:
      (loss, correct): scalar float32 loss, scalar int32 count.
    """
    n, d = inputs.shape

    if block_k is None:
        block_k = d if d <= _SINGLE_STEP_MAX_D else _TK_LARGE
    if block_k >= d:
        tk = d              # single-step: block == full feature dim, no masking
    else:
        assert block_k % 128 == 0, "block_k must be lane-aligned (multiple of 128)"
        tk = block_k
    num_k = pl.cdiv(d, tk)

    t_col = targets.reshape(n, 1).astype(jnp.int32)
    t_row = targets.reshape(1, n).astype(jnp.int32)

    loss, correct = pl.pallas_call(
        functools.partial(_triplet_kernel, float(margin), int(d), int(tk)),
        out_shape=(jax.ShapeDtypeStruct((1, 1), jnp.float32),
                   jax.ShapeDtypeStruct((1, 1), jnp.int32)),
        grid_spec=pltpu.PrefetchScalarGridSpec(
            num_scalar_prefetch=0,
            grid=(num_k,),
            in_specs=[
                pl.BlockSpec((n, tk), lambda k: (0, k)),      # feature chunk
                pl.BlockSpec((n, 1), lambda k: (0, 0)),       # labels (column)
                pl.BlockSpec((1, n), lambda k: (0, 0)),       # labels (row)
            ],
            out_specs=(
                pl.BlockSpec((1, 1), lambda k: (0, 0)),
                pl.BlockSpec((1, 1), lambda k: (0, 0)),
            ),
            scratch_shapes=[
                pltpu.VMEM((n, n), jnp.float32),              # Gram accumulator
                pltpu.VMEM((n, 1), jnp.float32),              # squared-norm accumulator
            ],
        ),
        compiler_params=pltpu.CompilerParams(
            dimension_semantics=("arbitrary",)),              # reduction axis
    )(inputs, t_col, t_row)
    return loss[0, 0], correct[0, 0]


def _reference(inputs, targets, margin=0.3):
    """Pure-JAX reference mirroring the PyTorch module."""
    inputs = inputs.astype(jnp.float32)
    sq = jnp.sum(inputs * inputs, axis=1, keepdims=True)
    dist = sq + sq.T - 2.0 * (inputs @ inputs.T)
    dist = jnp.sqrt(jnp.clip(dist, 1e-12, None))
    mask = targets[:, None] == targets[None, :]
    dist_ap = jnp.max(jnp.where(mask, dist, -jnp.inf), axis=1)
    dist_an = jnp.min(jnp.where(mask, jnp.inf, dist), axis=1)
    loss = jnp.mean(jnp.maximum(dist_ap - dist_an + margin, 0.0))
    correct = jnp.sum(dist_an >= dist_ap).astype(jnp.int32)
    return loss, correct


if __name__ == "__main__":
    key = jax.random.PRNGKey(0)
    # 4 identities, 2 samples each (each sample has >=1 positive and negatives).
    targets = jnp.array([0, 0, 1, 1, 2, 2, 3, 3], dtype=jnp.int32)
    n = targets.shape[0]

    # Case 1: small feature dim -> single-step grid path (no K tiling).
    k1, k2 = jax.random.split(key)
    x1 = jax.random.normal(k1, (n, 32), dtype=jnp.float32)
    loss1, correct1 = ori_triplet_loss(x1, targets, margin=0.3)
    jax.block_until_ready((loss1, correct1))
    ref_loss1, ref_correct1 = _reference(x1, targets, margin=0.3)
    assert jnp.allclose(loss1, ref_loss1, atol=1e-5, rtol=1e-5), (loss1, ref_loss1)
    assert int(correct1) == int(ref_correct1), (correct1, ref_correct1)

    # Case 2: d not a multiple of the tile -> multi-step grid with in-kernel
    # tail masking (forced via block_k=128 to exercise the tiled path).
    x2 = jax.random.normal(k2, (n, 200), dtype=jnp.float32)
    loss2, correct2 = ori_triplet_loss(x2, targets, margin=0.3, block_k=128)
    jax.block_until_ready((loss2, correct2))
    ref_loss2, ref_correct2 = _reference(x2, targets, margin=0.3)
    assert jnp.allclose(loss2, ref_loss2, atol=1e-5, rtol=1e-5), (loss2, ref_loss2)
    assert int(correct2) == int(ref_correct2), (correct2, ref_correct2)

    print("KERNEL_OK")
</pallas_src>

<mosaic_0001>
module attributes {stable_mosaic.version = 11 : i64} {
  func.func @_triplet_kernel(%arg0: i32, %arg1: memref<8x32xf32, #tpu.memory_space<vmem>>, %arg2: memref<8x1xi32, #tpu.memory_space<vmem>>, %arg3: memref<1x8xi32, #tpu.memory_space<vmem>>, %arg4: memref<1x1xf32, #tpu.memory_space<vmem>>, %arg5: memref<1x1xi32, #tpu.memory_space<vmem>>, %arg6: memref<8x8xf32, #tpu.memory_space<vmem>>, %arg7: memref<8x1xf32, #tpu.memory_space<vmem>>) attributes {dimension_semantics = [#tpu.dimension_semantics<arbitrary>], iteration_bounds = array<i64: 1>, scalar_prefetch = 0 : i64, scratch_operands = 2 : i64, tpu.core_type = #tpu.core_type<tc>, window_params = [{transform_indices = @transform_0, window_bounds = array<i64: 8, 32>}, {pipeline_mode = #tpu.pipeline_mode<synchronous>, transform_indices = @transform_1, window_bounds = array<i64: 8, 1>}, {pipeline_mode = #tpu.pipeline_mode<synchronous>, transform_indices = @transform_2, window_bounds = array<i64: 1, 8>}, {pipeline_mode = #tpu.pipeline_mode<synchronous>, transform_indices = @transform_3, window_bounds = array<i64: 1, 1>}, {pipeline_mode = #tpu.pipeline_mode<synchronous>, transform_indices = @transform_4, window_bounds = array<i64: 1, 1>}]} {
    %c0_i32 = arith.constant 0 : i32
    %0 = arith.cmpi eq, %arg0, %c0_i32 : i32
    %1 = arith.extui %0 : i1 to i32
    %c0_i32_0 = arith.constant 0 : i32
    %2 = arith.cmpi ne, %1, %c0_i32_0 : i32
    scf.if %2 {
      %cst_13 = arith.constant 0.000000e+00 : f32
      %17 = vector.broadcast %cst_13 : f32 to vector<8x8xf32>
      %c0_14 = arith.constant 0 : index
      %c0_15 = arith.constant 0 : index
      %18 = vector.load %arg6[%c0_14, %c0_15] : memref<8x8xf32, #tpu.memory_space<vmem>>, vector<8x8xf32>
      tpu.vector_store %arg6[%c0_14, %c0_15], %17 {strides = array<i32>} : memref<8x8xf32, #tpu.memory_space<vmem>>, vector<8x8xf32>,
      %cst_16 = arith.constant 0.000000e+00 : f32
      %19 = vector.broadcast %cst_16 : f32 to vector<8x1xf32>
      %c0_17 = arith.constant 0 : index
      %c0_18 = arith.constant 0 : index
      %20 = vector.load %arg7[%c0_17, %c0_18] : memref<8x1xf32, #tpu.memory_space<vmem>>, vector<8x1xf32>
      tpu.vector_store %arg7[%c0_17, %c0_18], %19 {strides = array<i32>} : memref<8x1xf32, #tpu.memory_space<vmem>>, vector<8x1xf32>,
    } else {
    }
    %c0 = arith.constant 0 : index
    %c0_1 = arith.constant 0 : index
    %3 = vector.load %arg1[%c0, %c0_1] : memref<8x32xf32, #tpu.memory_space<vmem>>, vector<8x32xf32>
    %c0_2 = arith.constant 0 : index
    %c0_3 = arith.constant 0 : index
    %4 = vector.load %arg7[%c0_2, %c0_3] : memref<8x1xf32, #tpu.memory_space<vmem>>, vector<8x1xf32>
    %5 = arith.mulf %3, %3 : vector<8x32xf32>
    %cst = arith.constant dense<0.000000e+00> : vector<8xf32>
    %6 = vector.multi_reduction <add>, %5, %cst [1] : vector<8x32xf32> to vector<8xf32>
    %7 = vector.shape_cast %6 : vector<8xf32> to vector<8x1xf32>
    %8 = arith.addf %4, %7 : vector<8x1xf32>
    %c0_4 = arith.constant 0 : index
    %c0_5 = arith.constant 0 : index
    %9 = vector.load %arg7[%c0_4, %c0_5] : memref<8x1xf32, #tpu.memory_space<vmem>>, vector<8x1xf32>
    tpu.vector_store %arg7[%c0_4, %c0_5], %8 {strides = array<i32>} : memref<8x1xf32, #tpu.memory_space<vmem>>, vector<8x1xf32>,
    %c0_6 = arith.constant 0 : index
    %c0_7 = arith.constant 0 : index
    %10 = vector.load %arg6[%c0_6, %c0_7] : memref<8x8xf32, #tpu.memory_space<vmem>>, vector<8x8xf32>
    %cst_8 = arith.constant dense<0.000000e+00> : vector<8x8xf32>
    %11 = tpu.matmul %3, %3, %cst_8 {dimension_numbers = #tpu.dot_dimension_numbers<[1], [1], [0], [0], [0, 0, 1, 0], [], []>} : vector<8x32xf32>, vector<8x32xf32>, vector<8x8xf32> -> vector<8x8xf32>
    %12 = arith.addf %10, %11 : vector<8x8xf32>
    %c0_9 = arith.constant 0 : index
    %c0_10 = arith.constant 0 : index
    %13 = vector.load %arg6[%c0_9, %c0_10] : memref<8x8xf32, #tpu.memory_space<vmem>>, vector<8x8xf32>
    tpu.vector_store %arg6[%c0_9, %c0_10], %12 {strides = array<i32>} : memref<8x8xf32, #tpu.memory_space<vmem>>, vector<8x8xf32>,
    %c0_i32_11 = arith.constant 0 : i32
    %14 = arith.cmpi eq, %arg0, %c0_i32_11 : i32
    %15 = arith.extui %14 : i1 to i32
    %c0_i32_12 = arith.constant 0 : i32
    %16 = arith.cmpi ne, %15, %c0_i32_12 : i32
    scf.if %16 {
      %c0_13 = arith.constant 0 : index
      %c0_14 = arith.constant 0 : index
      %17 = vector.load %arg6[%c0_13, %c0_14] : memref<8x8xf32, #tpu.memory_space<vmem>>, vector<8x8xf32>
      %c0_15 = arith.constant 0 : index
      %c0_16 = arith.constant 0 : index
      %18 = vector.load %arg7[%c0_15, %c0_16] : memref<8x1xf32, #tpu.memory_space<vmem>>, vector<8x1xf32>
      %19 = tpu.transpose %18, [1, 0] : vector<8x1xf32> -> vector<1x8xf32>
      %20 = vector.broadcast %18 : vector<8x1xf32> to vector<8x8xf32>
      %21 = vector.broadcast %19 : vector<1x8xf32> to vector<8x8xf32>
      %22 = arith.addf %20, %21 : vector<8x8xf32>
      %cst_17 = arith.constant 2.000000e+00 : f32
      %23 = vector.broadcast %cst_17 : f32 to vector<8x8xf32>
      %24 = arith.mulf %23, %17 : vector<8x8xf32>
      %25 = arith.subf %22, %24 : vector<8x8xf32>
      %c0_18 = arith.constant 0 : index
      %c0_19 = arith.constant 0 : index
      %26 = vector.load %arg2[%c0_18, %c0_19] : memref<8x1xi32, #tpu.memory_space<vmem>>, vector<8x1xi32>
      %c0_20 = arith.constant 0 : index
      %c0_21 = arith.constant 0 : index
      %27 = vector.load %arg3[%c0_20, %c0_21] : memref<1x8xi32, #tpu.memory_space<vmem>>, vector<1x8xi32>
      %28 = vector.broadcast %26 : vector<8x1xi32> to vector<8x8xi32>
      %29 = vector.broadcast %27 : vector<1x8xi32> to vector<8x8xi32>
      %30 = arith.cmpi eq, %28, %29 : vector<8x8xi32>
      %cst_22 = arith.constant 0xFF800000 : f32
      %31 = vector.broadcast %cst_22 : f32 to vector<8x8xf32>
      %32 = arith.select %30, %25, %31 : vector<8x8xi1>, vector<8x8xf32>
      %cst_23 = arith.constant dense<0xFF800000> : vector<8xf32>
      %33 = vector.multi_reduction <maximumf>, %32, %cst_23 [1] : vector<8x8xf32> to vector<8xf32>
      %34 = vector.shape_cast %33 : vector<8xf32> to vector<8x1xf32>
      %cst_24 = arith.constant 0x7F800000 : f32
      %35 = vector.broadcast %cst_24 : f32 to vector<8x8xf32>
      %36 = arith.select %30, %35, %25 : vector<8x8xi1>, vector<8x8xf32>
      %cst_25 = arith.constant dense<0x7F800000> : vector<8xf32>
      %37 = vector.multi_reduction <minimumf>, %36, %cst_25 [1] : vector<8x8xf32> to vector<8xf32>
      %38 = vector.shape_cast %37 : vector<8xf32> to vector<8x1xf32>
      %cst_26 = arith.constant 9.99999996E-13 : f32
      %39 = vector.broadcast %cst_26 : f32 to vector<8x1xf32>
      %40 = arith.maximumf %34, %39 : vector<8x1xf32>
      %41 = math.sqrt %40 : vector<8x1xf32>
      %cst_27 = arith.constant 9.99999996E-13 : f32
      %42 = vector.broadcast %cst_27 : f32 to vector<8x1xf32>
      %43 = arith.maximumf %38, %42 : vector<8x1xf32>
      %44 = math.sqrt %43 : vector<8x1xf32>
      %45 = arith.subf %41, %44 : vector<8x1xf32>
      %cst_28 = arith.constant 3.000000e-01 : f32
      %46 = vector.broadcast %cst_28 : f32 to vector<8x1xf32>
      %47 = arith.addf %45, %46 : vector<8x1xf32>
      %cst_29 = arith.constant 0.000000e+00 : f32
      %48 = vector.broadcast %cst_29 : f32 to vector<8x1xf32>
      %49 = arith.maximumf %47, %48 : vector<8x1xf32>
      %50 = vector.shape_cast %49 : vector<8x1xf32> to vector<1x8x1xf32>
      %cst_30 = arith.constant dense<0.000000e+00> : vector<1xf32>
      %51 = vector.multi_reduction <add>, %50, %cst_30 [1, 2] : vector<1x8x1xf32> to vector<1xf32>
      %52 = vector.shape_cast %51 : vector<1xf32> to vector<1x1x1xf32>
      %53 = vector.extract %52[0, 0, 0] : f32 from vector<1x1x1xf32>
      %54 = vector.broadcast %53 : f32 to vector<1x1xf32>
      %cst_31 = arith.constant 1.250000e-01 : f32
      %55 = vector.broadcast %cst_31 : f32 to vector<1x1xf32>
      %56 = arith.mulf %54, %55 : vector<1x1xf32>
      %c0_32 = arith.constant 0 : index
      %c0_33 = arith.constant 0 : index
      %57 = vector.load %arg4[%c0_32, %c0_33] : memref<1x1xf32, #tpu.memory_space<vmem>>, vector<1x1xf32>
      tpu.vector_store %arg4[%c0_32, %c0_33], %56 {strides = array<i32>} : memref<1x1xf32, #tpu.memory_space<vmem>>, vector<1x1xf32>,
      %58 = arith.cmpf oge, %44, %41 : vector<8x1xf32>
      %59 = arith.extui %58 : vector<8x1xi1> to vector<8x1xi32>
      %60 = arith.sitofp %59 : vector<8x1xi32> to vector<8x1xf32>
      %61 = vector.shape_cast %60 : vector<8x1xf32> to vector<1x8x1xf32>
      %cst_34 = arith.constant dense<0.000000e+00> : vector<1xf32>
      %62 = vector.multi_reduction <add>, %61, %cst_34 [1, 2] : vector<1x8x1xf32> to vector<1xf32>
      %63 = vector.shape_cast %62 : vector<1xf32> to vector<1x1x1xf32>
      %64 = vector.extract %63[0, 0, 0] : f32 from vector<1x1x1xf32>
      %65 = vector.broadcast %64 : f32 to vector<1x1xf32>
      %66 = arith.fptosi %65 : vector<1x1xf32> to vector<1x1xi32>
      %c0_35 = arith.constant 0 : index
      %c0_36 = arith.constant 0 : index
      %67 = vector.load %arg5[%c0_35, %c0_36] : memref<1x1xi32, #tpu.memory_space<vmem>>, vector<1x1xi32>
      tpu.vector_store %arg5[%c0_35, %c0_36], %66 {strides = array<i32>} : memref<1x1xi32, #tpu.memory_space<vmem>>, vector<1x1xi32>,
    } else {
    }
    return
  }
  func.func @transform_0(%arg0: i32) -> (i32, i32) {
    %c0_i32 = arith.constant 0 : i32
    %c0_i32_0 = arith.constant 0 : i32
    return %c0_i32, %arg0 : i32, i32
  }
  func.func @transform_1(%arg0: i32) -> (i32, i32) {
    %c0_i32 = arith.constant 0 : i32
    %c0_i32_0 = arith.constant 0 : i32
    %c0_i32_1 = arith.constant 0 : i32
    return %c0_i32, %c0_i32_0 : i32, i32
  }
  func.func @transform_2(%arg0: i32) -> (i32, i32) {
    %c0_i32 = arith.constant 0 : i32
    %c0_i32_0 = arith.constant 0 : i32
    %c0_i32_1 = arith.constant 0 : i32
    return %c0_i32, %c0_i32_0 : i32, i32
  }
  func.func @transform_3(%arg0: i32) -> (i32, i32) {
    %c0_i32 = arith.constant 0 : i32
    %c0_i32_0 = arith.constant 0 : i32
    %c0_i32_1 = arith.constant 0 : i32
    return %c0_i32, %c0_i32_0 : i32, i32
  }
  func.func @transform_4(%arg0: i32) -> (i32, i32) {
    %c0_i32 = arith.constant 0 : i32
    %c0_i32_0 = arith.constant 0 : i32
    %c0_i32_1 = arith.constant 0 : i32
    return %c0_i32, %c0_i32_0 : i32, i32
  }
}

</mosaic_0001>

<llo_original>
// kernel: tpu_custom_call.1
$region0: #{tpu_custom_call.1}
  #allocation0 [shape = 'u32[]', space=smem, size = 0x4, offset = 0x4, fixed_abs, tag = 'smem constant byte address 0x4 - core index']
  #allocation1 [shape = 'u32[144,128]{1,0:T(1,128)}', space=vmem, size = 0x12000, scoped, tag = 'internal scratch']
  #allocation2 [shape = 'f32[8,8]{1,0:T(8,128)}', space=vmem, size = 0x1000, scoped, tag = 'scratch operand']
  #allocation3 [shape = 'f32[8,1]{1,0:T(8,128)}', space=vmem, size = 0x1000, scoped, tag = 'scratch operand']
  %s0 = inlined_call_operand.vmem [shape: f32[8,32], index: 0, kind: input, shape index: {}]
  %s1 = inlined_call_operand.vmem [shape: s32[8,1], index: 1, kind: input, shape index: {}]
  %s2 = inlined_call_operand.vmem [shape: s32[1,8], index: 2, kind: input, shape index: {}]
  %s3 = inlined_call_operand.hbm [shape: f32[1,1], index: 3, kind: output, shape index: {0}]
  %s4 = inlined_call_operand.hbm [shape: s32[1,1], index: 4, kind: output, shape index: {1}]
  %5 = xla_tuple %s3, %s4
  %s6 = sld [smem:[#allocation0]]
  $region38: #{tpu_custom_call.1} parent=0
    _
  %s8 = ssub.s32 1, %s6
  %s9 = scalar_select 0, %s8, %s6
  $region1: #{tpu_custom_call.1} parent=0
    #allocation4 [shape = 'u8[512]{0}', space=vmem, size = 0x400, scoped, tag = 'output window, operand 0, single buffered']
    #allocation5 [shape = 's32[1]{0}', space=sflag, size = 0x4, scoped, tag = 'scoped memory for tpu_custom_call.1']
    #allocation6 [shape = 'u8[512]{0}', space=vmem, size = 0x400, scoped, tag = 'output window, operand 1, single buffered']
    #allocation7 [shape = 's32[1]{0}', space=sflag, size = 0x4, scoped, tag = 'scoped memory for tpu_custom_call.1']
    %10 = vsyncpa [#allocation5], 0
    %11 = vsyncpa [#allocation7], 0
    // Predicated region
    $region2: #{tpu_custom_call.1} parent=1 // pred_check
      _
    $region3: #{tpu_custom_call.1} parent=1 // pred_check_branch
      %13 = sbr.rel (0) target = $region5
    $region4: #{tpu_custom_call.1} parent=1 // pred_region
      _
    $region5: #{tpu_custom_call.1} parent=1 // pred_fallthru
      _
    // Predicated region
    $region6: #{tpu_custom_call.1} parent=1 // pred_check
      _
    $region7: #{tpu_custom_call.1} parent=1 // pred_check_branch
      %15 = sbr.rel (0) target = $region9
    $region8: #{tpu_custom_call.1} parent=1 // pred_region
      _
    $region9: #{tpu_custom_call.1} parent=1 // pred_fallthru
      _
    // Predicated region
    $region10: #{tpu_custom_call.1} parent=1 // pred_check
      _
    $region11: #{tpu_custom_call.1} parent=1 // pred_check_branch
      %17 = sbr.rel (0) target = $region13
    $region12: #{tpu_custom_call.1} parent=1 // pred_region
      _
    $region13: #{tpu_custom_call.1} parent=1 // pred_fallthru
      _
    %p18 = scmp.eq.s32.totalorder 0, 0
    // Predicated region
    $region14: #{tpu_custom_call.1} parent=1 // pred_check
      %p19 = pneg %p18
    $region15: #{tpu_custom_call.1} parent=1 // pred_check_branch
      %21 = sbr.rel (%p19) target = $region17
    $region16: #{tpu_custom_call.1} parent=1 // pred_region
      %vm22 = vcmask 64512
      %23 = vst.msk [vmem:[#allocation2] sm:$0xff] %vm22, 0.0
      %vm24 = vcmask 7168
      %25 = vst.msk [vmem:[#allocation3] sm:$0xff] %vm24, 0.0
    $region17: #{tpu_custom_call.1} parent=1 // pred_fallthru
      _
    %v26 = vld [vmem:[%s0] sm:$0xff]
    %v27 = vld [vmem:[#allocation3] sm:$0xff]
    %v28 = vmul.f32 %v26, %v26
    %vm29 = vcmask 261120
    %v30 = vsel %vm29, %v28, 0.0
    %31 = vadd.xlane.f32.xlu0 %v30
    %v32 = vpop.xlane.xlu0 %31
    %v33 = vadd.f32 %v27, %v32
    %vm34 = vcmask 7168
    %35 = vst.msk [vmem:[#allocation3] sm:$0xff] %vm34, %v33
    %v36 = vld [vmem:[#allocation2] sm:$0xff]
    %v38 = vsel %vm29, %v26, 0
    %40 = vmatprep.subr.mxu0 0.0
    %41 = vmatpush1.xpose.msra.mxu0 %v38
    %42 = vmatprep.subr.mxu0 0.0
    %43 = vmatpush1.xpose.msra.mxu0 0.0
    %44 = vmatprep.subr.mxu0 0.0
    %45 = vmatpush1.xpose.msra.mxu0 0.0
    %46 = vmatprep.subr.mxu0 0.0
    %47 = vmatpush1.xpose.msra.mxu0 0.0
    %48 = vmatprep.subr.mxu0 0.0
    %49 = vmatpush1.xpose.msra.mxu0 0.0
    %50 = vmatprep.subr.mxu0 0.0
    %51 = vmatpush1.xpose.msra.mxu0 0.0
    %52 = vmatprep.subr.mxu0 0.0
    %53 = vmatpush1.xpose.msra.mxu0 0.0
    %54 = vmatprep.subr.mxu0 0.0
    %55 = vmatpush1.xpose.msra.mxu0 0.0
    %56 = vmatprep.subr.mxu0 0.0
    %57 = vmatpush1.xpose.msra.mxu0 0.0
    %58 = vmatprep.subr.mxu0 0.0
    %59 = vmatpush1.xpose.msra.mxu0 0.0
    %60 = vmatprep.subr.mxu0 0.0
    %61 = vmatpush1.xpose.msra.mxu0 0.0
    %62 = vmatprep.subr.mxu0 0.0
    %63 = vmatpush1.xpose.msra.mxu0 0.0
    %64 = vmatprep.subr.mxu0 0.0
    %65 = vmatpush1.xpose.msra.mxu0 0.0
    %66 = vmatprep.subr.mxu0 0.0
    %67 = vmatpush1.xpose.msra.mxu0 0.0
    %68 = vmatprep.subr.mxu0 0.0
    %69 = vmatpush1.xpose.msra.mxu0 0.0
    %70 = vmatprep.subr.mxu0 0.0
    %71 = vmatpush1.xpose.msra.mxu0 0.0
    %72 = vmatprep.subr.mxu0 0.0
    %73 = vmatpush1.xpose.msra.mxu0 0.0
    %74 = vmatprep.subr.mxu0 0.0
    %75 = vmatpush1.xpose.msra.mxu0 0.0
    %76 = vmatprep.subr.mxu0 0.0
    %77 = vmatpush1.xpose.msra.mxu0 0.0
    %78 = vmatprep.subr.mxu0 0.0
    %79 = vmatpush1.xpose.msra.mxu0 0.0
    %80 = vmatprep.subr.mxu0 0.0
    %81 = vmatpush1.xpose.msra.mxu0 0.0
    %82 = vmatprep.subr.mxu0 0.0
    %83 = vmatpush1.xpose.msra.mxu0 0.0
    %84 = vmatprep.subr.mxu0 0.0
    %85 = vmatpush1.xpose.msra.mxu0 0.0
    %86 = vmatprep.subr.mxu0 0.0
    %87 = vmatpush1.xpose.msra.mxu0 0.0
    %88 = vmatprep.subr.mxu0 0.0
    %89 = vmatpush1.xpose.msra.mxu0 0.0
    %90 = vmatprep.subr.mxu0 0.0
    %91 = vmatpush1.xpose.msra.mxu0 0.0
    %92 = vmatprep.subr.mxu0 0.0
    %93 = vmatpush1.xpose.msra.mxu0 0.0
    %94 = vmatprep.subr.mxu0 0.0
    %95 = vmatpush1.xpose.msra.mxu0 0.0
    %96 = vmatprep.subr.mxu0 0.0
    %97 = vmatpush1.xpose.msra.mxu0 0.0
    %98 = vmatprep.subr.mxu0 0.0
    %99 = vmatpush1.xpose.msra.mxu0 0.0
    %100 = vmatprep.subr.mxu0 0.0
    %101 = vmatpush1.xpose.msra.mxu0 0.0
    %102 = vmatprep.subr.mxu0 0.0
    %103 = vmatpush1.xpose.msra.mxu0 0.0
    %104 = vmatprep.mubr.f32.mxu0 0.0
    %105 = vmatmul.mubr.f32.gmra.mrb[0].mxu0 %v38
    %v106 = vpop.f32.mrb[0].mxu0
    %v107 = vadd.f32 0.0, %v106
    %v108 = vpop.f32.mrb[0].mxu0
    %109 = vdwg.mxu0
    %v110 = vadd.f32 %v36, %v107
    %vm111 = vcmask 64512
    %112 = vst.msk [vmem:[#allocation2] sm:$0xff] %vm111, %v110
    // Predicated region
    $region18: #{tpu_custom_call.1} parent=1 // pred_check
      %p113 = pneg %p18
    $region19: #{tpu_custom_call.1} parent=1 // pred_check_branch
      %115 = sbr.rel (%p113) target = $region21
    $region20: #{tpu_custom_call.1} parent=1 // pred_region
      %v116 = vld [vmem:[#allocation2] sm:$0xff]
      %v117 = vld [vmem:[#allocation3] sm:$0xff]
      %118 = vxpose.xlu0.b32.start [1/16] %v117, 128
      %119 = vxpose.xlu0.b32.cont [2/16] 0.0, 128
      %120 = vxpose.xlu0.b32.cont [3/16] 0.0, 128
      %121 = vxpose.xlu0.b32.cont [4/16] 0.0, 128
      %122 = vxpose.xlu0.b32.cont [5/16] 0.0, 128
      %123 = vxpose.xlu0.b32.cont [6/16] 0.0, 128
      %124 = vxpose.xlu0.b32.cont [7/16] 0.0, 128
      %125 = vxpose.xlu0.b32.cont [8/16] 0.0, 128
      %126 = vxpose.xlu0.b32.cont [9/16] 0.0, 128
      %127 = vxpose.xlu0.b32.cont [10/16] 0.0, 128
      %128 = vxpose.xlu0.b32.cont [11/16] 0.0, 128
      %129 = vxpose.xlu0.b32.cont [12/16] 0.0, 128
      %130 = vxpose.xlu0.b32.cont [13/16] 0.0, 128
      %131 = vxpose.xlu0.b32.cont [14/16] 0.0, 128
      %132 = vxpose.xlu0.b32.cont [15/16] 0.0, 128
      %133 = vxpose.xlu0.b32.end [16/16] 0.0, 128
      %v134 = vpop.trf.xlu0
      %v135 = vpop.trf.xlu0
      %v136 = vpop.trf.xlu0
      %v137 = vpop.trf.xlu0
      %v138 = vpop.trf.xlu0
      %v139 = vpop.trf.xlu0
      %v140 = vpop.trf.xlu0
      %v141 = vpop.trf.xlu0
      %v142 = vpop.trf.xlu0
      %v143 = vpop.trf.xlu0
      %v144 = vpop.trf.xlu0
      %v145 = vpop.trf.xlu0
      %v146 = vpop.trf.xlu0
      %v147 = vpop.trf.xlu0
      %v148 = vpop.trf.xlu0
      %v149 = vpop.trf.xlu0
      %151 = vset.pattern.permute.xlu0 0
      %152 = vperm.xlu0 %151, %v117
      %v153 = vpop.permute.xlu0 %152
      %v155 = vlaneseq
      %v156 = vshrl.u32 %v155, 7
      %v157 = vsub.s32 0, %v156
      %v158 = vrot.slane %v134, %v157
      %v159 = vadd.f32 %v153, %v158
      %v160 = vmul.f32 %v116, 2.0
      %v161 = vsub.f32 %v159, %v160
      %v162 = vld [vmem:[%s1] sm:$0xff]
      %v163 = vld [vmem:[%s2] sm:$0x1]
      %164 = vset.pattern.permute.xlu0 0
      %165 = vperm.xlu0 %164, %v162
      %v166 = vpop.permute.xlu0 %165
      %v167 = vlaneseq
      %v168 = vshrl.u32 %v167, 7
      %v169 = vsub.s32 0, %v168
      %v170 = vrot.slane %v163, %v169
      %vm171 = vcmp.eq.s32.totalorder %v166, %v170
      %v172 = vsel %vm171, %v161, -inf
      %v173 = vsel %vm111, %v172, -inf
      %174 = vmax.xlane.f32.xlu0 %v173
      %v175 = vpop.xlane.xlu0 %174
      %v176 = vsel %vm171, inf, %v161
      %v177 = vsel %vm111, %v176, inf
      %178 = vmin.xlane.f32.xlu0 %v177
      %v179 = vpop.xlane.xlu0 %178
      %v180 = vmax.f32 %v175, 1e-12
      %v181 = vrsqrt.pop %v180
      %v182 = vmul.f32 %v180, %v181
      %vm183 = vcmp.eq.f32.partialorder %v180, inf
      %v184 = vsel %vm183, %v180, %v182
      %vm185 = vcmp.eq.f32.partialorder %v180, 0.0
      %v186 = vand.u32 %v180, 2147483648
      %v187 = vsel %vm185, %v186, %v184
      %v188 = vmax.f32 %v179, 1e-12
      %v189 = vrsqrt.pop %v188
      %v190 = vmul.f32 %v188, %v189
      %vm191 = vcmp.eq.f32.partialorder %v188, inf
      %v192 = vsel %vm191, %v188, %v190
      %vm193 = vcmp.eq.f32.partialorder %v188, 0.0
      %v194 = vand.u32 %v188, 2147483648
      %v195 = vsel %vm193, %v194, %v192
      %v196 = vsub.f32 %v187, %v195
      %v197 = vadd.f32 %v196, 0.3
      %v198 = vmax.f32 %v197, 0.0
      %v199 = vsel %vm34, %v198, 0.0
      %200 = vadd.xlane.f32.xlu0 %v199
      %v201 = vpop.xlane.xlu0 %200
      %v202 = vrot.slane %v201, 4
      %v203 = vadd.f32 %v201, %v202
      %v204 = vrot.slane %v203, 2
      %v205 = vadd.f32 %v203, %v204
      %v206 = vrot.slane %v205, 1
      %v207 = vadd.f32 %v205, %v206
      %s208 = vtos %v207
      %v209 = vstv %s208
      %v210 = vmul.f32 %v209, 0.125
      %vm211 = vcmask 0
      %212 = vst.msk [vmem:[#allocation4] sm:$0x1] %vm211, %v210
      %vm213 = vcmp.ge.f32.partialorder %v195, %v187
      %v214 = vsel %vm213, 1, 0
      %v215 = vcvt.s32.f32 %v214
      %v216 = vsel %vm34, %v215, 0.0
      %217 = vadd.xlane.f32.xlu0 %v216
      %v218 = vpop.xlane.xlu0 %217
      %v219 = vrot.slane %v218, 4
      %v220 = vadd.f32 %v218, %v219
      %v221 = vrot.slane %v220, 2
      %v222 = vadd.f32 %v220, %v221
      %v223 = vrot.slane %v222, 1
      %v224 = vadd.f32 %v222, %v223
      %s225 = vtos %v224
      %v226 = vstv %s225
      %v227 = vcvt.f32.s32.to.zero.pseudo %v226
      %228 = vst.msk [vmem:[#allocation6] sm:$0x1] %vm211, %v227
    $region21: #{tpu_custom_call.1} parent=1 // pred_fallthru
      _
    // Predicated region
    $region22: #{tpu_custom_call.1} parent=1 // pred_check
      _
    $region23: #{tpu_custom_call.1} parent=1 // pred_check_branch
      %230 = sbr.rel (0) target = $region25
    $region24: #{tpu_custom_call.1} parent=1 // pred_region
      %s232 = ssub.s32 16, 16
      %233 = vsyncadd [#allocation5], %s232
      %s235 = sshll.u32 [#allocation4], 4
      %s236 = int_to_ptr.vmem [resolvable:$true] %s235
      %238 = dma.vmem_to_hbm [thread:$0]  %s236, 16, %s3, [#allocation5]
    $region25: #{tpu_custom_call.1} parent=1 // pred_fallthru
      _
    // Predicated region
    $region26: #{tpu_custom_call.1} parent=1 // pred_check
      _
    $region27: #{tpu_custom_call.1} parent=1 // pred_check_branch
      %240 = sbr.rel (0) target = $region29
    $region28: #{tpu_custom_call.1} parent=1 // pred_region
      %s242 = ssub.s32 16, 16
      %243 = vsyncadd [#allocation7], %s242
      %s245 = sshll.u32 [#allocation6], 4
      %s246 = int_to_ptr.vmem [resolvable:$true] %s245
      %248 = dma.vmem_to_hbm [thread:$0]  %s246, 16, %s4, [#allocation7]
    $region29: #{tpu_custom_call.1} parent=1 // pred_fallthru
      _
    // Predicated region
    $region30: #{tpu_custom_call.1} parent=1 // pred_check
      _
    $region31: #{tpu_custom_call.1} parent=1 // pred_check_branch
      %250 = sbr.rel (0) target = $region33
    $region32: #{tpu_custom_call.1} parent=1 // pred_region
      %251 = dma.done [#allocation5], 16
    $region33: #{tpu_custom_call.1} parent=1 // pred_fallthru
      _
    // Predicated region
    $region34: #{tpu_custom_call.1} parent=1 // pred_check
      _
    $region35: #{tpu_custom_call.1} parent=1 // pred_check_branch
      %253 = sbr.rel (0) target = $region37
    $region36: #{tpu_custom_call.1} parent=1 // pred_region
      %254 = dma.done [#allocation7], 16
    $region37: #{tpu_custom_call.1} parent=1 // pred_fallthru
      _
    %255 = vsyncpa [#allocation5], 1
    %256 = vsyncpa [#allocation7], 1

</llo_original>
